<compile_context>
chip_gen: v7x
topology: tpu7x:2x2x1
jax: 0.10.0
libtpu: 0.0.40
codegen_flags: <defaults>
</compile_context>

<pallas_src>
import functools

import jax
import jax.numpy as jnp
from jax import lax
from jax.experimental import pallas as pl
from jax.experimental.pallas import tpu as pltpu


_EPS = 1e-12           # F.normalize eps
_TEMP_NTXENT = 0.07    # NTXentLoss temperature used inside SupCLR_Loss.forward


def _round_up(x, m):
    return ((x + m - 1) // m) * m


def _chip_config():
    """(vmem_limit_bytes, n_tensorcores) from the attached device generation."""
    kind = ""
    try:
        kind = jax.devices()[0].device_kind.lower()
    except Exception:
        pass
    if "v7" in kind or "7x" in kind:
        # v7x: 64 MiB VMEM per TC, 2 TCs per chip -> leave compiler headroom.
        return 40 * 1024 * 1024, 2
    # v5e / v6e: 128 MiB VMEM, 1 TC per chip.
    return 64 * 1024 * 1024, 1


def _tiles(n, vmem_limit_bytes, n_cores):
    """(n_pad, tile_m, tile_k) for the row/key tiling of the NT-Xent pass."""
    n_pad = _round_up(n, 128)                 # lane-dense padding
    if n_pad <= 256:
        if n_cores > 1 and n_pad == 256:
            return 256, 128, 128              # two row tiles so both TCs get work
        return n_pad, n_pad, n_pad            # single tile each way
    n_pad = _round_up(n, 256)
    tk = 256
    tm = 512
    # tm must divide n_pad; keep >= one row tile per TensorCore.
    while tm > 256 and (n_pad % tm != 0 or (n_pad // tm) < n_cores):
        tm //= 2

    # kernel-C VMEM estimate: bf16 lnq x2 (double buffer), bf16 lnk x2, bf16 ebuf.
    def _vmem_c(tm_):
        return (2 * tm_ + 2 * tk + tm_) * n_pad * 2 + 2 * 1024 * 1024

    while tm > 256 and _vmem_c(tm) > int(0.8 * vmem_limit_bytes):
        tm //= 2
    return n_pad, tm, tk


# --------------------------------------------------------------------------- #
# Kernel A: row-wise L2 normalization of the feature vectors (done once).
# --------------------------------------------------------------------------- #
def _l2norm_kernel(x_ref, o_ref):
    x = x_ref[...].astype(jnp.float32)
    # one reciprocal per row, then a broadcast multiply (no per-element divide)
    inv = 1.0 / jnp.maximum(jnp.sqrt(jnp.sum(x * x, axis=1, keepdims=True)), _EPS)
    o_ref[...] = x * inv


# --------------------------------------------------------------------------- #
# Kernel B: ln = row-normalize((xn @ xn.T) * (1/temperature)), row-tiled.
#           xn (already normalized) stays fully resident; row tiles stream.
#           Output is bf16 (MXU operand for kernel C); math stays in f32.
# --------------------------------------------------------------------------- #
def _ln_rows_kernel(xt_ref, xall_ref, o_ref, *, inv_temp):
    xt = xt_ref[...]                                   # (TM, D)
    xa = xall_ref[...]                                 # (N_pad, D) resident
    logits = lax.dot_general(xt, xa, (((1,), (1,)), ((), ())),
                             preferred_element_type=jnp.float32) * inv_temp   # (TM, N_pad)
    inv = 1.0 / jnp.maximum(
        jnp.sqrt(jnp.sum(logits * logits, axis=1, keepdims=True)), _EPS)      # (TM, 1)
    o_ref[...] = (logits * inv).astype(o_ref.dtype)


# --------------------------------------------------------------------------- #
# Kernel C: flash-style NT-Xent over s = (ln @ ln.T) * (1/0.07).
#   grid = (row tiles i [parallel], key tiles k [arbitrary])
#   pass 1 (every k): s tile (bf16 MXU operands, f32 acc) -> e = exp(s - C) in f32,
#                     store POSITIVE-MASKED e (bf16) into ebuf, accumulate per-row
#                     masked negative exp-sum, positive count and positive shift-sum.
#   pass 2 (last k) : re-sweep ebuf in TK chunks; p = e_c > 0 identifies positives,
#                     accumulate sum_pos log(neg_sum + e_c)  (full-row denominator
#                     now known).  Fixed shift C = 1/0.07 since |s| <= 1/0.07.
# --------------------------------------------------------------------------- #
def _ntxent_kernel(labq_ref, labr_ref, lnq_ref, lnk_ref,        # inputs
                   loss_ref, cnt_ref,                           # outputs (per row tile)
                   ebuf_ref, negsum_ref, pcnt_ref, pshift_ref,  # scratch
                   *, n_valid, tm, tk, gk, inv_nt):
    i = pl.program_id(0)
    k = pl.program_id(1)

    @pl.when(k == 0)
    def _init():
        negsum_ref[...] = jnp.zeros_like(negsum_ref)
        pcnt_ref[...] = jnp.zeros_like(pcnt_ref)
        pshift_ref[...] = jnp.zeros_like(pshift_ref)

    # ------------------ pass 1 for this key tile ------------------
    col0 = pl.multiple_of(k * tk, tk)
    lab_q = labq_ref[...]                              # (TM, 1)  int32
    lab_k = labr_ref[:, pl.ds(col0, tk)]               # (1, TK)  int32

    # bf16 MXU operands, f32 accumulation; all elementwise math below stays f32.
    s = lax.dot_general(lnq_ref[...], lnk_ref[...], (((1,), (1,)), ((), ())),
                        preferred_element_type=jnp.float32) * inv_nt          # (TM, TK)
    e = jnp.exp(s - inv_nt)                            # fixed shift C = 1/0.07, |s| <= C

    row = i * tm + lax.broadcasted_iota(jnp.int32, (tm, tk), 0)
    col = col0 + lax.broadcasted_iota(jnp.int32, (tm, tk), 1)
    valid = jnp.logical_and(row < n_valid, col < n_valid)
    same = lab_q == lab_k
    neg = jnp.logical_and(jnp.logical_not(same), valid)
    pos = jnp.logical_and(jnp.logical_and(same, valid), row != col)
    posf = pos.astype(jnp.float32)

    # positive-masked exp, bf16 storage (exp(s-C) > 0 always -> no false negatives)
    ebuf_ref[:, pl.ds(col0, tk)] = jnp.where(pos, e, 0.0).astype(ebuf_ref.dtype)

    negsum_ref[...] += jnp.sum(jnp.where(neg, e, 0.0), axis=1, keepdims=True)
    pcnt_ref[...] += jnp.sum(posf, axis=1, keepdims=True)
    pshift_ref[...] += jnp.sum(posf * (s - inv_nt), axis=1, keepdims=True)

    # ------------------ pass 2: finalize this row tile ------------------
    @pl.when(k == gk - 1)
    def _finalize():
        neg_sum = negsum_ref[...]                      # (TM, 1) complete

        def body(t, carry):
            c0 = pl.multiple_of(t * tk, tk)
            e_c = ebuf_ref[:, pl.ds(c0, tk)].astype(jnp.float32)   # (TM, TK), pos-masked
            den = neg_sum + e_c                        # denominator per positive pair
            return carry + jnp.sum(jnp.where(e_c > 0.0, jnp.log(den), 0.0),
                                   axis=1, keepdims=True)

        pos_logden = lax.fori_loop(0, gk, body, jnp.zeros((tm, 1), jnp.float32))
        loss_part = jnp.sum(pos_logden - pshift_ref[...], keepdims=True)   # (1,1)
        cnt_part = jnp.sum(pcnt_ref[...], keepdims=True)                   # (1,1)
        loss_ref[...] = jnp.zeros((8, 128), jnp.float32) + loss_part
        cnt_ref[...] = jnp.zeros((8, 128), jnp.float32) + cnt_part


def _ntxent_from_ln(ln, lab_col, lab_row, n_valid, n_pad, tm, tk, vmem_limit):
    gm, gk = n_pad // tm, n_pad // tk
    kern = functools.partial(_ntxent_kernel, n_valid=n_valid, tm=tm, tk=tk,
                             gk=gk, inv_nt=float(1.0 / _TEMP_NTXENT))
    # NOTE: the lnq block index (i,0) is constant over k, so it is fetched once per row
    # tile; the extra double buffer it still occupies is included in the _tiles() VMEM
    # budget (pipeline_mode buffer-count overrides are intentionally not relied upon).
    out_loss, out_cnt = pl.pallas_call(
        kern,
        out_shape=(jax.ShapeDtypeStruct((gm * 8, 128), jnp.float32),
                   jax.ShapeDtypeStruct((gm * 8, 128), jnp.float32)),
        grid_spec=pltpu.PrefetchScalarGridSpec(
            num_scalar_prefetch=0,
            grid=(gm, gk),
            in_specs=[
                pl.BlockSpec((tm, 1), lambda i, k: (i, 0)),        # query labels (column)
                pl.BlockSpec((1, n_pad), lambda i, k: (0, 0)),     # all labels (row), resident
                pl.BlockSpec((tm, n_pad), lambda i, k: (i, 0)),    # ln query rows (bf16), resident over k
                pl.BlockSpec((tk, n_pad), lambda i, k: (k, 0)),    # ln key rows (bf16), streamed
            ],
            out_specs=[
                pl.BlockSpec((8, 128), lambda i, k: (i, 0)),
                pl.BlockSpec((8, 128), lambda i, k: (i, 0)),
            ],
            scratch_shapes=[
                pltpu.VMEM((tm, n_pad), jnp.bfloat16),  # positive-masked exp(s - C) row block
                pltpu.VMEM((tm, 1), jnp.float32),       # per-row masked negative exp-sum
                pltpu.VMEM((tm, 1), jnp.float32),       # per-row positive-pair count
                pltpu.VMEM((tm, 1), jnp.float32),       # per-row sum over positives of (s - C)
            ]),
        compiler_params=pltpu.CompilerParams(
            dimension_semantics=("parallel", "arbitrary"),
            vmem_limit_bytes=vmem_limit),
    )(lab_col, lab_row, ln, ln)
    return out_loss, out_cnt


def supclr_loss(feature_vectors, labels, temperature=0.1):
    """Pallas implementation of SupCLR_Loss.forward."""
    fv_in = jnp.asarray(feature_vectors, jnp.float32)
    n = fv_in.shape[0]
    lab = jnp.reshape(jnp.asarray(labels), (-1,)).astype(jnp.int32)  # torch.squeeze(labels)

    vmem_limit, n_cores = _chip_config()
    n_pad, tm, tk = _tiles(n, vmem_limit, n_cores)
    assert n_pad % tm == 0 and n_pad % tk == 0
    gm = n_pad // tm

    labp = jnp.pad(lab, (0, n_pad - n), constant_values=-1)   # masked out via validity anyway
    lab_col = labp.reshape(n_pad, 1)
    lab_row = labp.reshape(1, n_pad)

    # --- kernel A: xn = F.normalize(x, p=2, dim=1) (computed exactly once) ---
    if fv_in.ndim == 2:
        d = fv_in.shape[1]
        x = jnp.pad(fv_in, ((0, n_pad - n), (0, 0)))          # zero rows -> zero ln rows
        xn = pl.pallas_call(
            _l2norm_kernel,
            out_shape=jax.ShapeDtypeStruct((n_pad, d), jnp.float32),
            grid_spec=pltpu.PrefetchScalarGridSpec(
                num_scalar_prefetch=0, grid=(gm,),
                in_specs=[pl.BlockSpec((tm, d), lambda i: (i, 0))],
                out_specs=pl.BlockSpec((tm, d), lambda i: (i, 0))),
            compiler_params=pltpu.CompilerParams(
                dimension_semantics=("parallel",),
                vmem_limit_bytes=vmem_limit),
        )(x)
    else:
        # F.normalize(p=2, dim=1) on a >2D tensor normalizes per dim-1 slice BEFORE the
        # .view(N, -1); this O(N*D) step is cheap JAX glue outside the O(N^2)/O(N^3) path.
        nrm = jnp.sqrt(jnp.sum(fv_in * fv_in, axis=1, keepdims=True))
        xnf = (fv_in / jnp.maximum(nrm, _EPS)).reshape(n, -1)
        d = xnf.shape[1]
        xn = jnp.pad(xnf, ((0, n_pad - n), (0, 0)))

    # --- kernel B: ln = row-normalize((xn @ xn.T) / temperature), row-tiled, bf16 out ---
    kern_b = functools.partial(_ln_rows_kernel, inv_temp=float(1.0 / temperature))
    ln = pl.pallas_call(
        kern_b,
        out_shape=jax.ShapeDtypeStruct((n_pad, n_pad), jnp.bfloat16),
        grid_spec=pltpu.PrefetchScalarGridSpec(
            num_scalar_prefetch=0, grid=(gm,),
            in_specs=[pl.BlockSpec((tm, d), lambda i: (i, 0)),      # row tile of xn
                      pl.BlockSpec((n_pad, d), lambda i: (0, 0))],  # full xn, resident
            out_specs=pl.BlockSpec((tm, n_pad), lambda i: (i, 0))),
        compiler_params=pltpu.CompilerParams(
            dimension_semantics=("parallel",),
            vmem_limit_bytes=vmem_limit),
    )(xn, xn)

    # --- kernel C: flash-style NT-Xent reduction to per-row-tile partials ---
    out_loss, out_cnt = _ntxent_from_ln(ln, lab_col, lab_row, n, n_pad, tm, tk, vmem_limit)

    # tiny O(grid) finalization glue
    part_loss = out_loss.reshape(gm, 8, 128)[:, 0, 0]
    part_cnt = out_cnt.reshape(gm, 8, 128)[:, 0, 0]
    total = jnp.sum(part_loss)
    cnt = jnp.sum(part_cnt)
    return jnp.where(cnt > 0.0, total / jnp.maximum(cnt, 1.0), jnp.float32(0.0))


# --------------------------------------------------------------------------- #
# Pure-JAX reference (mirrors the pytorch_metric_learning NTXentLoss math).
# --------------------------------------------------------------------------- #
def _reference_loss(feature_vectors, labels, temperature=0.1, temp_nt=_TEMP_NTXENT):
    x = jnp.asarray(feature_vectors, jnp.float32)
    n = x.shape[0]
    x = x.reshape(n, -1)
    xn = x / jnp.maximum(jnp.linalg.norm(x, axis=1, keepdims=True), _EPS)
    logits = (xn @ xn.T) / temperature
    ln = logits / jnp.maximum(jnp.linalg.norm(logits, axis=1, keepdims=True), _EPS)
    s = (ln @ ln.T) / temp_nt
    lab = jnp.reshape(labels, (-1,))
    same = lab[:, None] == lab[None, :]
    eye = jnp.eye(n, dtype=bool)
    pos = same & ~eye
    neg = ~same
    neg_s = jnp.where(neg, s, -jnp.inf)
    neg_max = jnp.max(neg_s, axis=1, keepdims=True)
    max_val = jnp.maximum(s, neg_max)
    num = jnp.exp(s - max_val)
    neg_exp_sum = jnp.sum(jnp.where(neg, jnp.exp(s - neg_max), 0.0), axis=1, keepdims=True)
    den = neg_exp_sum * jnp.exp(neg_max - max_val) + num
    per_pair = -jnp.log(num / den + 1.1754944e-38)
    pos_f = pos.astype(jnp.float32)
    cnt = jnp.sum(pos_f)
    return jnp.where(cnt > 0, jnp.sum(per_pair * pos_f) / jnp.maximum(cnt, 1.0), 0.0)


if __name__ == "__main__":
    # SupCLR_Loss has no learnable parameters (temperature constants only).
    key = jax.random.PRNGKey(0)
    k1, k2, k3, k4 = jax.random.split(key, 4)

    # --- small smoke test (single-tile path, lane-dense pad to 128) ----------
    n, d = 8, 32
    fv = jax.random.normal(k1, (n, d), dtype=jnp.float32)
    lab = jax.random.randint(k2, (n, 1), 0, 4, dtype=jnp.int32)      # (N,1), squeezed in forward
    loss = jax.block_until_ready(supclr_loss(fv, lab, temperature=0.1))
    ref = _reference_loss(fv, lab, temperature=0.1)
    assert jnp.isfinite(loss), "kernel produced non-finite loss"
    # bf16 MXU operands for ln push error to ~1e-3..1e-2 relative (f32 accumulation kept)
    assert jnp.allclose(loss, ref, rtol=2e-2, atol=2e-2), (loss, ref)

    # --- larger test: exercises the tiled grid + zero-padding + bf16 path ----
    n2, d2 = 520, 48                                   # pads to 768 -> TM=TK=256, 3x3 grid
    fv2 = jax.random.normal(k3, (n2, d2), dtype=jnp.float32)
    lab2 = jax.random.randint(k4, (n2, 1), 0, 7, dtype=jnp.int32)
    loss2 = jax.block_until_ready(supclr_loss(fv2, lab2, temperature=0.1))
    ref2 = _reference_loss(fv2, lab2, temperature=0.1)
    assert jnp.isfinite(loss2), "kernel produced non-finite loss (tiled path)"
    assert jnp.allclose(loss2, ref2, rtol=2e-2, atol=2e-2), (loss2, ref2)

    print("KERNEL_OK")
</pallas_src>

<mosaic_0001>
module attributes {stable_mosaic.version = 11 : i64} {
  func.func @_l2norm_kernel(%arg0: i32, %arg1: memref<128x32xf32, #tpu.memory_space<vmem>>, %arg2: memref<128x32xf32, #tpu.memory_space<vmem>>) attributes {dimension_semantics = [#tpu.dimension_semantics<parallel>], iteration_bounds = array<i64: 1>, scalar_prefetch = 0 : i64, scratch_operands = 0 : i64, tpu.core_type = #tpu.core_type<tc>, window_params = [{transform_indices = @transform_0, window_bounds = array<i64: 128, 32>}, {transform_indices = @transform_1, window_bounds = array<i64: 128, 32>}]} {
    %c0 = arith.constant 0 : index
    %c0_0 = arith.constant 0 : index
    %0 = vector.load %arg1[%c0, %c0_0] : memref<128x32xf32, #tpu.memory_space<vmem>>, vector<128x32xf32>
    %1 = arith.mulf %0, %0 : vector<128x32xf32>
    %cst = arith.constant dense<0.000000e+00> : vector<128xf32>
    %2 = vector.multi_reduction <add>, %1, %cst [1] : vector<128x32xf32> to vector<128xf32>
    %3 = vector.shape_cast %2 : vector<128xf32> to vector<128x1xf32>
    %4 = math.sqrt %3 : vector<128x1xf32>
    %cst_1 = arith.constant 9.99999996E-13 : f32
    %5 = vector.broadcast %cst_1 : f32 to vector<128x1xf32>
    %6 = arith.maximumf %4, %5 : vector<128x1xf32>
    %cst_2 = arith.constant 1.000000e+00 : f32
    %7 = vector.broadcast %cst_2 : f32 to vector<128x1xf32>
    %8 = arith.divf %7, %6 : vector<128x1xf32>
    %9 = vector.broadcast %8 : vector<128x1xf32> to vector<128x32xf32>
    %10 = arith.mulf %0, %9 : vector<128x32xf32>
    %c0_3 = arith.constant 0 : index
    %c0_4 = arith.constant 0 : index
    %11 = vector.load %arg2[%c0_3, %c0_4] : memref<128x32xf32, #tpu.memory_space<vmem>>, vector<128x32xf32>
    tpu.vector_store %arg2[%c0_3, %c0_4], %10 {strides = array<i32>} : memref<128x32xf32, #tpu.memory_space<vmem>>, vector<128x32xf32>,
    return
  }
  func.func @transform_0(%arg0: i32) -> (i32, i32) {
    %c0_i32 = arith.constant 0 : i32
    %c0_i32_0 = arith.constant 0 : i32
    return %arg0, %c0_i32 : i32, i32
  }
  func.func @transform_1(%arg0: i32) -> (i32, i32) {
    %c0_i32 = arith.constant 0 : i32
    %c0_i32_0 = arith.constant 0 : i32
    return %arg0, %c0_i32 : i32, i32
  }
}

</mosaic_0001>

<llo_original>
// kernel: tpu_custom_call.1
$region0: #{tpu_custom_call.1}
  #allocation0 [shape = 'u32[]', space=smem, size = 0x4, offset = 0x4, fixed_abs, tag = 'smem constant byte address 0x4 - core index']
  #allocation1 [shape = 'u32[144,128]{1,0:T(1,128)}', space=vmem, size = 0x12000, scoped, tag = 'internal scratch']
  %s0 = inlined_call_operand.hbm [shape: f32[128,32], index: 0, kind: input, shape index: {}]
  %s1 = inlined_call_operand.hbm [shape: f32[128,32], index: 1, kind: output, shape index: {}]
  %s2 = sld [smem:[#allocation0]]
  $region18: #{tpu_custom_call.1} parent=0
    _
  %s4 = ssub.s32 1, %s2
  %s5 = scalar_select 0, %s4, %s2
  $region1: #{tpu_custom_call.1} parent=0
    #allocation2 [shape = 'u8[65536]{0}', space=vmem, size = 0x10000, scoped, tag = 'input window, operand 0, single buffered']
    #allocation3 [shape = 's32[1]{0}', space=sflag, size = 0x4, scoped, tag = 'scoped memory for tpu_custom_call.1']
    #allocation4 [shape = 's32[1]{0}', space=sflag, size = 0x4, scoped, tag = 'scoped memory for tpu_custom_call.1']
    #allocation5 [shape = 'u8[65536]{0}', space=vmem, size = 0x10000, scoped, tag = 'output window, operand 0, single buffered']
    %6 = vsyncpa [#allocation3], 0
    %7 = vsyncpa [#allocation4], 0
    // Predicated region
    $region2: #{tpu_custom_call.1} parent=1 // pred_check
      _
    $region3: #{tpu_custom_call.1} parent=1 // pred_check_branch
      %9 = sbr.rel (0) target = $region5
    $region4: #{tpu_custom_call.1} parent=1 // pred_region
      %s11 = ssub.s32 2048, 2048
      %12 = vsyncadd [#allocation3], %s11
      %s13 = sshll.u32 [#allocation2], 4
      %s14 = int_to_ptr.vmem [resolvable:$true] %s13
      %19 = dma.hbm_to_vmem [thread:$0]  %s0, 2048, %s14, [#allocation3], 128, 128, 8
    $region5: #{tpu_custom_call.1} parent=1 // pred_fallthru
      _
    // Predicated region
    $region6: #{tpu_custom_call.1} parent=1 // pred_check
      _
    $region7: #{tpu_custom_call.1} parent=1 // pred_check_branch
      %21 = sbr.rel (0) target = $region9
    $region8: #{tpu_custom_call.1} parent=1 // pred_region
      %22 = dma.done [#allocation3], 2048
    $region9: #{tpu_custom_call.1} parent=1 // pred_fallthru
      _
    %v23 = vld [vmem:[#allocation2] sm:$0xff]
    %v24 = vld [vmem:[#allocation2 + $0x8] sm:$0xff]
    %v25 = vld [vmem:[#allocation2 + $0x10] sm:$0xff]
    %v26 = vld [vmem:[#allocation2 + $0x18] sm:$0xff]
    %v27 = vld [vmem:[#allocation2 + $0x20] sm:$0xff]
    %v28 = vld [vmem:[#allocation2 + $0x28] sm:$0xff]
    %v29 = vld [vmem:[#allocation2 + $0x30] sm:$0xff]
    %v30 = vld [vmem:[#allocation2 + $0x38] sm:$0xff]
    %v31 = vld [vmem:[#allocation2 + $0x40] sm:$0xff]
    %v32 = vld [vmem:[#allocation2 + $0x48] sm:$0xff]
    %v33 = vld [vmem:[#allocation2 + $0x50] sm:$0xff]
    %v34 = vld [vmem:[#allocation2 + $0x58] sm:$0xff]
    %v35 = vld [vmem:[#allocation2 + $0x60] sm:$0xff]
    %v36 = vld [vmem:[#allocation2 + $0x68] sm:$0xff]
    %v37 = vld [vmem:[#allocation2 + $0x70] sm:$0xff]
    %v38 = vld [vmem:[#allocation2 + $0x78] sm:$0xff]
    %v39 = vmul.f32 %v23, %v23
    %v40 = vmul.f32 %v24, %v24
    %v41 = vmul.f32 %v25, %v25
    %v42 = vmul.f32 %v26, %v26
    %v43 = vmul.f32 %v27, %v27
    %v44 = vmul.f32 %v28, %v28
    %v45 = vmul.f32 %v29, %v29
    %v46 = vmul.f32 %v30, %v30
    %v47 = vmul.f32 %v31, %v31
    %v48 = vmul.f32 %v32, %v32
    %v49 = vmul.f32 %v33, %v33
    %v50 = vmul.f32 %v34, %v34
    %v51 = vmul.f32 %v35, %v35
    %v52 = vmul.f32 %v36, %v36
    %v53 = vmul.f32 %v37, %v37
    %v54 = vmul.f32 %v38, %v38
    %vm55 = vcmask 261120
    %v56 = vsel %vm55, %v39, 0.0
    %57 = vadd.xlane.f32.xlu0 %v56
    %v58 = vpop.xlane.xlu0 %57
    %v59 = vsel %vm55, %v40, 0.0
    %60 = vadd.xlane.f32.xlu0 %v59
    %v61 = vpop.xlane.xlu0 %60
    %v62 = vsel %vm55, %v41, 0.0
    %63 = vadd.xlane.f32.xlu0 %v62
    %v64 = vpop.xlane.xlu0 %63
    %v65 = vsel %vm55, %v42, 0.0
    %66 = vadd.xlane.f32.xlu0 %v65
    %v67 = vpop.xlane.xlu0 %66
    %v68 = vsel %vm55, %v43, 0.0
    %69 = vadd.xlane.f32.xlu0 %v68
    %v70 = vpop.xlane.xlu0 %69
    %v71 = vsel %vm55, %v44, 0.0
    %72 = vadd.xlane.f32.xlu0 %v71
    %v73 = vpop.xlane.xlu0 %72
    %v74 = vsel %vm55, %v45, 0.0
    %75 = vadd.xlane.f32.xlu0 %v74
    %v76 = vpop.xlane.xlu0 %75
    %v77 = vsel %vm55, %v46, 0.0
    %78 = vadd.xlane.f32.xlu0 %v77
    %v79 = vpop.xlane.xlu0 %78
    %v80 = vsel %vm55, %v47, 0.0
    %81 = vadd.xlane.f32.xlu0 %v80
    %v82 = vpop.xlane.xlu0 %81
    %v83 = vsel %vm55, %v48, 0.0
    %84 = vadd.xlane.f32.xlu0 %v83
    %v85 = vpop.xlane.xlu0 %84
    %v86 = vsel %vm55, %v49, 0.0
    %87 = vadd.xlane.f32.xlu0 %v86
    %v88 = vpop.xlane.xlu0 %87
    %v89 = vsel %vm55, %v50, 0.0
    %90 = vadd.xlane.f32.xlu0 %v89
    %v91 = vpop.xlane.xlu0 %90
    %v92 = vsel %vm55, %v51, 0.0
    %93 = vadd.xlane.f32.xlu0 %v92
    %v94 = vpop.xlane.xlu0 %93
    %v95 = vsel %vm55, %v52, 0.0
    %96 = vadd.xlane.f32.xlu0 %v95
    %v97 = vpop.xlane.xlu0 %96
    %v98 = vsel %vm55, %v53, 0.0
    %99 = vadd.xlane.f32.xlu0 %v98
    %v100 = vpop.xlane.xlu0 %99
    %v101 = vsel %vm55, %v54, 0.0
    %102 = vadd.xlane.f32.xlu0 %v101
    %v103 = vpop.xlane.xlu0 %102
    %v104 = vrsqrt.pop %v58
    %v105 = vmul.f32 %v58, %v104
    %vm106 = vcmp.eq.f32.partialorder %v58, inf
    %v107 = vsel %vm106, %v58, %v105
    %vm108 = vcmp.eq.f32.partialorder %v58, 0.0
    %v109 = vand.u32 %v58, 2147483648
    %v110 = vsel %vm108, %v109, %v107
    %v111 = vrsqrt.pop %v61
    %v112 = vmul.f32 %v61, %v111
    %vm113 = vcmp.eq.f32.partialorder %v61, inf
    %v114 = vsel %vm113, %v61, %v112
    %vm115 = vcmp.eq.f32.partialorder %v61, 0.0
    %v116 = vand.u32 %v61, 2147483648
    %v117 = vsel %vm115, %v116, %v114
    %v118 = vrsqrt.pop %v64
    %v119 = vmul.f32 %v64, %v118
    %vm120 = vcmp.eq.f32.partialorder %v64, inf
    %v121 = vsel %vm120, %v64, %v119
    %vm122 = vcmp.eq.f32.partialorder %v64, 0.0
    %v123 = vand.u32 %v64, 2147483648
    %v124 = vsel %vm122, %v123, %v121
    %v125 = vrsqrt.pop %v67
    %v126 = vmul.f32 %v67, %v125
    %vm127 = vcmp.eq.f32.partialorder %v67, inf
    %v128 = vsel %vm127, %v67, %v126
    %vm129 = vcmp.eq.f32.partialorder %v67, 0.0
    %v130 = vand.u32 %v67, 2147483648
    %v131 = vsel %vm129, %v130, %v128
    %v132 = vrsqrt.pop %v70
    %v133 = vmul.f32 %v70, %v132
    %vm134 = vcmp.eq.f32.partialorder %v70, inf
    %v135 = vsel %vm134, %v70, %v133
    %vm136 = vcmp.eq.f32.partialorder %v70, 0.0
    %v137 = vand.u32 %v70, 2147483648
    %v138 = vsel %vm136, %v137, %v135
    %v139 = vrsqrt.pop %v73
    %v140 = vmul.f32 %v73, %v139
    %vm141 = vcmp.eq.f32.partialorder %v73, inf
    %v142 = vsel %vm141, %v73, %v140
    %vm143 = vcmp.eq.f32.partialorder %v73, 0.0
    %v144 = vand.u32 %v73, 2147483648
    %v145 = vsel %vm143, %v144, %v142
    %v146 = vrsqrt.pop %v76
    %v147 = vmul.f32 %v76, %v146
    %vm148 = vcmp.eq.f32.partialorder %v76, inf
    %v149 = vsel %vm148, %v76, %v147
    %vm150 = vcmp.eq.f32.partialorder %v76, 0.0
    %v151 = vand.u32 %v76, 2147483648
    %v152 = vsel %vm150, %v151, %v149
    %v153 = vrsqrt.pop %v79
    %v154 = vmul.f32 %v79, %v153
    %vm155 = vcmp.eq.f32.partialorder %v79, inf
    %v156 = vsel %vm155, %v79, %v154
    %vm157 = vcmp.eq.f32.partialorder %v79, 0.0
    %v158 = vand.u32 %v79, 2147483648
    %v159 = vsel %vm157, %v158, %v156
    %v160 = vrsqrt.pop %v82
    %v161 = vmul.f32 %v82, %v160
    %vm162 = vcmp.eq.f32.partialorder %v82, inf
    %v163 = vsel %vm162, %v82, %v161
    %vm164 = vcmp.eq.f32.partialorder %v82, 0.0
    %v165 = vand.u32 %v82, 2147483648
    %v166 = vsel %vm164, %v165, %v163
    %v167 = vrsqrt.pop %v85
    %v168 = vmul.f32 %v85, %v167
    %vm169 = vcmp.eq.f32.partialorder %v85, inf
    %v170 = vsel %vm169, %v85, %v168
    %vm171 = vcmp.eq.f32.partialorder %v85, 0.0
    %v172 = vand.u32 %v85, 2147483648
    %v173 = vsel %vm171, %v172, %v170
    %v174 = vrsqrt.pop %v88
    %v175 = vmul.f32 %v88, %v174
    %vm176 = vcmp.eq.f32.partialorder %v88, inf
    %v177 = vsel %vm176, %v88, %v175
    %vm178 = vcmp.eq.f32.partialorder %v88, 0.0
    %v179 = vand.u32 %v88, 2147483648
    %v180 = vsel %vm178, %v179, %v177
    %v181 = vrsqrt.pop %v91
    %v182 = vmul.f32 %v91, %v181
    %vm183 = vcmp.eq.f32.partialorder %v91, inf
    %v184 = vsel %vm183, %v91, %v182
    %vm185 = vcmp.eq.f32.partialorder %v91, 0.0
    %v186 = vand.u32 %v91, 2147483648
    %v187 = vsel %vm185, %v186, %v184
    %v188 = vrsqrt.pop %v94
    %v189 = vmul.f32 %v94, %v188
    %vm190 = vcmp.eq.f32.partialorder %v94, inf
    %v191 = vsel %vm190, %v94, %v189
    %vm192 = vcmp.eq.f32.partialorder %v94, 0.0
    %v193 = vand.u32 %v94, 2147483648
    %v194 = vsel %vm192, %v193, %v191
    %v195 = vrsqrt.pop %v97
    %v196 = vmul.f32 %v97, %v195
    %vm197 = vcmp.eq.f32.partialorder %v97, inf
    %v198 = vsel %vm197, %v97, %v196
    %vm199 = vcmp.eq.f32.partialorder %v97, 0.0
    %v200 = vand.u32 %v97, 2147483648
    %v201 = vsel %vm199, %v200, %v198
    %v202 = vrsqrt.pop %v100
    %v203 = vmul.f32 %v100, %v202
    %vm204 = vcmp.eq.f32.partialorder %v100, inf
    %v205 = vsel %vm204, %v100, %v203
    %vm206 = vcmp.eq.f32.partialorder %v100, 0.0
    %v207 = vand.u32 %v100, 2147483648
    %v208 = vsel %vm206, %v207, %v205
    %v209 = vrsqrt.pop %v103
    %v210 = vmul.f32 %v103, %v209
    %vm211 = vcmp.eq.f32.partialorder %v103, inf
    %v212 = vsel %vm211, %v103, %v210
    %vm213 = vcmp.eq.f32.partialorder %v103, 0.0
    %v214 = vand.u32 %v103, 2147483648
    %v215 = vsel %vm213, %v214, %v212
    %v216 = vmax.f32 %v110, 1e-12
    %v217 = vmax.f32 %v117, 1e-12
    %v218 = vmax.f32 %v124, 1e-12
    %v219 = vmax.f32 %v131, 1e-12
    %v220 = vmax.f32 %v138, 1e-12
    %v221 = vmax.f32 %v145, 1e-12
    %v222 = vmax.f32 %v152, 1e-12
    %v223 = vmax.f32 %v159, 1e-12
    %v224 = vmax.f32 %v166, 1e-12
    %v225 = vmax.f32 %v173, 1e-12
    %v226 = vmax.f32 %v180, 1e-12
    %v227 = vmax.f32 %v187, 1e-12
    %v228 = vmax.f32 %v194, 1e-12
    %v229 = vmax.f32 %v201, 1e-12
    %v230 = vmax.f32 %v208, 1e-12
    %v231 = vmax.f32 %v215, 1e-12
    %v232 = vrcp.pop %v216
    %v233 = vmul.f32 1.0, %v232
    %v234 = vrcp.pop %v217
    %v235 = vmul.f32 1.0, %v234
    %v236 = vrcp.pop %v218
    %v237 = vmul.f32 1.0, %v236
    %v238 = vrcp.pop %v219
    %v239 = vmul.f32 1.0, %v238
    %v240 = vrcp.pop %v220
    %v241 = vmul.f32 1.0, %v240
    %v242 = vrcp.pop %v221
    %v243 = vmul.f32 1.0, %v242
    %v244 = vrcp.pop %v222
    %v245 = vmul.f32 1.0, %v244
    %v246 = vrcp.pop %v223
    %v247 = vmul.f32 1.0, %v246
    %v248 = vrcp.pop %v224
    %v249 = vmul.f32 1.0, %v248
    %v250 = vrcp.pop %v225
    %v251 = vmul.f32 1.0, %v250
    %v252 = vrcp.pop %v226
    %v253 = vmul.f32 1.0, %v252
    %v254 = vrcp.pop %v227
    %v255 = vmul.f32 1.0, %v254
    %v256 = vrcp.pop %v228
    %v257 = vmul.f32 1.0, %v256
    %v258 = vrcp.pop %v229
    %v259 = vmul.f32 1.0, %v258
    %v260 = vrcp.pop %v230
    %v261 = vmul.f32 1.0, %v260
    %v262 = vrcp.pop %v231
    %v263 = vmul.f32 1.0, %v262
    %v264 = vmul.f32 %v23, %v233
    %v265 = vmul.f32 %v24, %v235
    %v266 = vmul.f32 %v25, %v237
    %v267 = vmul.f32 %v26, %v239
    %v268 = vmul.f32 %v27, %v241
    %v269 = vmul.f32 %v28, %v243
    %v270 = vmul.f32 %v29, %v245
    %v271 = vmul.f32 %v30, %v247
    %v272 = vmul.f32 %v31, %v249
    %v273 = vmul.f32 %v32, %v251
    %v274 = vmul.f32 %v33, %v253
    %v275 = vmul.f32 %v34, %v255
    %v276 = vmul.f32 %v35, %v257
    %v277 = vmul.f32 %v36, %v259
    %v278 = vmul.f32 %v37, %v261
    %v279 = vmul.f32 %v38, %v263
    %280 = vst.msk [vmem:[#allocation5] sm:$0xff] %vm55, %v264
    %281 = vst.msk [vmem:[#allocation5 + $0x8] sm:$0xff] %vm55, %v265
    %282 = vst.msk [vmem:[#allocation5 + $0x10] sm:$0xff] %vm55, %v266
    %283 = vst.msk [vmem:[#allocation5 + $0x18] sm:$0xff] %vm55, %v267
    %284 = vst.msk [vmem:[#allocation5 + $0x20] sm:$0xff] %vm55, %v268
    %285 = vst.msk [vmem:[#allocation5 + $0x28] sm:$0xff] %vm55, %v269
    %286 = vst.msk [vmem:[#allocation5 + $0x30] sm:$0xff] %vm55, %v270
    %287 = vst.msk [vmem:[#allocation5 + $0x38] sm:$0xff] %vm55, %v271
    %288 = vst.msk [vmem:[#allocation5 + $0x40] sm:$0xff] %vm55, %v272
    %289 = vst.msk [vmem:[#allocation5 + $0x48] sm:$0xff] %vm55, %v273
    %290 = vst.msk [vmem:[#allocation5 + $0x50] sm:$0xff] %vm55, %v274
    %291 = vst.msk [vmem:[#allocation5 + $0x58] sm:$0xff] %vm55, %v275
    %292 = vst.msk [vmem:[#allocation5 + $0x60] sm:$0xff] %vm55, %v276
    %293 = vst.msk [vmem:[#allocation5 + $0x68] sm:$0xff] %vm55, %v277
    %294 = vst.msk [vmem:[#allocation5 + $0x70] sm:$0xff] %vm55, %v278
    %295 = vst.msk [vmem:[#allocation5 + $0x78] sm:$0xff] %vm55, %v279
    // Predicated region
    $region10: #{tpu_custom_call.1} parent=1 // pred_check
      _
    $region11: #{tpu_custom_call.1} parent=1 // pred_check_branch
      %297 = sbr.rel (0) target = $region13
    $region12: #{tpu_custom_call.1} parent=1 // pred_region
      %s299 = ssub.s32 2048, 2048
      %300 = vsyncadd [#allocation4], %s299
      %s301 = sshll.u32 [#allocation5], 4
      %s302 = int_to_ptr.vmem [resolvable:$true] %s301
      %307 = dma.vmem_to_hbm [thread:$0]  %s302, 2048, %s1, [#allocation4], 128, 128, 8
    $region13: #{tpu_custom_call.1} parent=1 // pred_fallthru
      _
    // Predicated region
    $region14: #{tpu_custom_call.1} parent=1 // pred_check
      _
    $region15: #{tpu_custom_call.1} parent=1 // pred_check_branch
      %309 = sbr.rel (0) target = $region17
    $region16: #{tpu_custom_call.1} parent=1 // pred_region
      %310 = dma.done [#allocation4], 2048
    $region17: #{tpu_custom_call.1} parent=1 // pred_fallthru
      _
    %311 = vsyncpa [#allocation3], 1
    %312 = vsyncpa [#allocation4], 1

</llo_original>
